<compile_context>
chip_gen: v5e
topology: v5e:2x2
jax: 0.10.0
libtpu: 0.0.40
codegen_flags: <defaults>
</compile_context>

<pallas_src>
import functools
import math

import jax
import jax.numpy as jnp
import numpy as np
from jax.experimental import pallas as pl
from jax.experimental.pallas import tpu as pltpu


def _round_up(x: int, m: int) -> int:
    return ((x + m - 1) // m) * m


def _pick_head_group(n_heads: int, tlq: int, lk: int,
                     budget_bytes: int = 4 << 20) -> int:
    """Largest divisor G of n_heads s.t. ~3 live f32 copies of (G,TLq,Lk) fit."""
    best = 1
    for g in range(1, n_heads + 1):
        if n_heads % g == 0 and 3 * g * tlq * lk * 4 <= budget_bytes:
            best = g
    return best


def _attn_core_kernel(q_ref, kT_ref, v_ref, bias_ref, ctx_ref, w_ref,
                      *, n_heads: int, head_group: int):
    """Attention core for one (batch, q-tile) grid step.

    q_ref:    (1, H, TLq, D)   compute dtype (bf16)
    kT_ref:   (1, H, D,  Lk)   compute dtype (pre-transposed K)
    v_ref:    (1, H, Lk, D)    compute dtype
    bias_ref: (1, 1, Lk)       f32 additive key-padding bias (0.0 / -1e30)
    ctx_ref:  (1, H, TLq, D)   per-head attention context (compute dtype)
    w_ref:    (1, TLq, Lk)     head-averaged attention probabilities (f32)
    """
    G = head_group
    n_groups = n_heads // G
    TLq = q_ref.shape[2]
    Lk = kT_ref.shape[3]

    bias = bias_ref[0]                                  # (1, Lk) f32

    def body(g, w_sum):
        h0 = pl.multiple_of(g * G, G)
        q = q_ref[0, pl.ds(h0, G)]                      # (G, TLq, D)
        kT = kT_ref[0, pl.ds(h0, G)]                    # (G, D, Lk)
        v = v_ref[0, pl.ds(h0, G)]                      # (G, Lk, D)

        # QK^T: contracts q's lane dim against kT's sublane dim (MXU-natural),
        # f32 accumulation.
        s = jnp.einsum('gld,gds->gls', q, kT,
                       preferred_element_type=jnp.float32)   # (G, TLq, Lk)
        s = s + bias[None, :, :]                              # key-padding bias

        # Softmax in f32.
        m = jnp.max(s, axis=-1, keepdims=True)
        p = jnp.exp(s - m)
        denom = jnp.sum(p, axis=-1, keepdims=True)
        probs = p * pl.reciprocal(denom, approx=True)         # (G, TLq, Lk)

        # P @ V, f32 accumulation on the MXU.
        ctx = jnp.einsum('gls,gsd->gld', probs.astype(v.dtype), v,
                         preferred_element_type=jnp.float32)  # (G, TLq, D)
        ctx_ref[0, pl.ds(h0, G)] = ctx.astype(ctx_ref.dtype)

        return w_sum + jnp.sum(probs, axis=0)

    w_sum = jax.lax.fori_loop(0, n_groups, body,
                              jnp.zeros((TLq, Lk), jnp.float32),
                              unroll=(n_groups <= 8))
    w_ref[0] = (w_sum * (1.0 / n_heads)).astype(w_ref.dtype)


def encoder_mha_pallas(query, key, value, key_padding_mask,
                       in_proj_weight, in_proj_bias,
                       out_proj_weight, out_proj_bias,
                       *, n_heads: int, q_tile: int = 256,
                       compute_dtype=jnp.bfloat16):
    """query/key/value: [B, L, E]; key_padding_mask: [B, Lk] bool (True = pad).

    Returns (attn_output [B, Lq, E], attn_weights averaged over heads
    [B, Lq, Lk]) matching torch.nn.MultiheadAttention eval-mode semantics.
    """
    B, Lq, E = query.shape
    Lk = key.shape[1]
    assert E % n_heads == 0, "hid_dim must be divisible by n_heads"
    D = E // n_heads
    scale = 1.0 / math.sqrt(D)

    # ---- Host/XLA-side prep (done once, outside the kernel) ----------------
    wq, wk, wv = jnp.split(in_proj_weight, 3, axis=0)        # (E, E) each
    bq, bk, bv = jnp.split(in_proj_bias, 3, axis=0)          # (E,)   each
    wq = wq * scale                                          # fold 1/sqrt(D)
    bq = bq * scale

    def proj(x, w, b, L):
        # One big MXU-friendly (B*L, E) x (E, E) matmul in XLA.
        y = x.reshape(B * L, E) @ w.T + b
        return y.reshape(B, L, n_heads, D)

    qh = proj(query, wq, bq, Lq).transpose(0, 2, 1, 3)       # (B, H, Lq, D)
    kT = proj(key, wk, bk, Lk).transpose(0, 2, 3, 1)         # (B, H, D,  Lk)
    vh = proj(value, wv, bv, Lk).transpose(0, 2, 1, 3)       # (B, H, Lk, D)

    # ---- Padding: lane-dense Lk, exact q-tiles -----------------------------
    Lk_pad = _round_up(Lk, 128)
    TLq = min(q_tile, _round_up(Lq, 8))
    Lq_pad = _round_up(Lq, TLq)
    n_q_tiles = Lq_pad // TLq

    if Lq_pad != Lq:
        qh = jnp.pad(qh, ((0, 0), (0, 0), (0, Lq_pad - Lq), (0, 0)))
    if Lk_pad != Lk:
        kT = jnp.pad(kT, ((0, 0), (0, 0), (0, 0), (0, Lk_pad - Lk)))
        vh = jnp.pad(vh, ((0, 0), (0, 0), (0, Lk_pad - Lk), (0, 0)))
    mask_pad = jnp.pad(key_padding_mask, ((0, 0), (0, Lk_pad - Lk)),
                       constant_values=True)
    # Additive key-padding bias (padding folded in), f32, added to f32 scores.
    bias = jnp.where(mask_pad, -1e30, 0.0).astype(jnp.float32)
    bias = bias.reshape(B, 1, Lk_pad)

    qh = qh.astype(compute_dtype)
    kT = kT.astype(compute_dtype)
    vh = vh.astype(compute_dtype)

    # ---- Head-group size & scoped-VMEM budget ------------------------------
    G = _pick_head_group(n_heads, TLq, Lk_pad)
    itm = jnp.dtype(compute_dtype).itemsize
    block_bytes = (
        2 * (n_heads * TLq * D * itm)        # q block, double-buffered
        + 2 * (n_heads * D * Lk_pad * itm)   # kT block
        + 2 * (n_heads * Lk_pad * D * itm)   # v block
        + 2 * (Lk_pad * 4)                   # bias block
        + 2 * (n_heads * TLq * D * itm)      # ctx out block
        + 2 * (TLq * Lk_pad * 4)             # weights out block
    )
    live_bytes = 4 * G * TLq * Lk_pad * 4 + TLq * Lk_pad * 4
    vmem_limit = int(min(100 * 2**20,
                         max(32 * 2**20, int(1.5 * (block_bytes + live_bytes)))))

    # ---- Pallas attention core ---------------------------------------------
    grid = (B, n_q_tiles)
    kernel = functools.partial(_attn_core_kernel,
                               n_heads=n_heads, head_group=G)

    out_shapes = (
        jax.ShapeDtypeStruct((B, n_heads, Lq_pad, D), compute_dtype),  # ctx
        jax.ShapeDtypeStruct((B, Lq_pad, Lk_pad), jnp.float32),        # avg w
    )

    grid_spec = pltpu.PrefetchScalarGridSpec(
        num_scalar_prefetch=0,
        grid=grid,
        in_specs=[
            # query heads: varies over (b, q-tile)
            pl.BlockSpec((1, n_heads, TLq, D), lambda b, i: (b, 0, i, 0)),
            # pre-transposed key / value heads: keyed on batch only (reused
            # across q-tiles; inner grid axis => no re-DMA between q-tiles)
            pl.BlockSpec((1, n_heads, D, Lk_pad), lambda b, i: (b, 0, 0, 0)),
            pl.BlockSpec((1, n_heads, Lk_pad, D), lambda b, i: (b, 0, 0, 0)),
            # key-padding bias
            pl.BlockSpec((1, 1, Lk_pad), lambda b, i: (b, 0, 0)),
        ],
        out_specs=[
            pl.BlockSpec((1, n_heads, TLq, D), lambda b, i: (b, 0, i, 0)),
            pl.BlockSpec((1, TLq, Lk_pad), lambda b, i: (b, i, 0)),
        ],
    )

    ctx, attn_w = pl.pallas_call(
        kernel,
        out_shape=out_shapes,
        grid_spec=grid_spec,
        compiler_params=pltpu.CompilerParams(
            dimension_semantics=("parallel", "parallel"),
            vmem_limit_bytes=vmem_limit),
    )(qh, kT, vh, bias)

    # ---- Output projection in XLA ------------------------------------------
    ctx = ctx[:, :, :Lq, :].transpose(0, 2, 1, 3).reshape(B, Lq, E)
    out = ctx.reshape(B * Lq, E) @ out_proj_weight.T + out_proj_bias
    out = out.reshape(B, Lq, E).astype(query.dtype)
    attn_w = attn_w[:, :Lq, :Lk].astype(query.dtype)
    return out, attn_w


def _reference_mha(query, key, value, key_padding_mask,
                   in_proj_weight, in_proj_bias,
                   out_proj_weight, out_proj_bias, n_heads):
    """Plain-JAX f32 reference mirroring torch.nn.MultiheadAttention (eval)."""
    B, Lq, E = query.shape
    Lk = key.shape[1]
    D = E // n_heads
    wq, wk, wv = jnp.split(in_proj_weight, 3, axis=0)
    bq, bk, bv = jnp.split(in_proj_bias, 3, axis=0)
    q = query @ wq.T + bq
    k = key @ wk.T + bk
    v = value @ wv.T + bv
    q = q.reshape(B, Lq, n_heads, D).transpose(0, 2, 1, 3) / np.sqrt(D)
    k = k.reshape(B, Lk, n_heads, D).transpose(0, 2, 1, 3)
    v = v.reshape(B, Lk, n_heads, D).transpose(0, 2, 1, 3)
    s = jnp.einsum('bhld,bhsd->bhls', q, k)
    bias = jnp.where(key_padding_mask[:, None, None, :], -1e30, 0.0)
    s = s + bias
    w = jax.nn.softmax(s, axis=-1)
    o = jnp.einsum('bhls,bhsd->bhld', w, v)
    o = o.transpose(0, 2, 1, 3).reshape(B, Lq, E)
    o = o @ out_proj_weight.T + out_proj_bias
    return o, w.mean(axis=1)


if __name__ == "__main__":
    B, L, E, H = 2, 8, 32, 4
    key0 = jax.random.PRNGKey(0)
    k1, k2, k3, k4, k5, k6, k7 = jax.random.split(key0, 7)

    # Inputs (self-attention style: query == key == value shapes).
    query = jax.random.normal(k1, (B, L, E), dtype=jnp.float32)
    key_ = jax.random.normal(k2, (B, L, E), dtype=jnp.float32)
    value = jax.random.normal(k3, (B, L, E), dtype=jnp.float32)
    # Pad last 2 positions of batch element 1.
    mask = jnp.zeros((B, L), dtype=bool).at[1, -2:].set(True)

    # Deterministic parameters (same shapes as nn.MultiheadAttention).
    in_proj_weight = 0.1 * jax.random.normal(k4, (3 * E, E), dtype=jnp.float32)
    in_proj_bias = 0.05 * jax.random.normal(k5, (3 * E,), dtype=jnp.float32)
    out_proj_weight = 0.1 * jax.random.normal(k6, (E, E), dtype=jnp.float32)
    out_proj_bias = 0.05 * jax.random.normal(k7, (E,), dtype=jnp.float32)

    attn_out, attn_w = encoder_mha_pallas(
        query, key_, value, mask,
        in_proj_weight, in_proj_bias, out_proj_weight, out_proj_bias,
        n_heads=H)
    jax.block_until_ready((attn_out, attn_w))

    ref_out, ref_w = _reference_mha(
        query, key_, value, mask,
        in_proj_weight, in_proj_bias, out_proj_weight, out_proj_bias, H)

    # bf16 MXU compute inside the kernel -> compare at relaxed tolerance.
    np.testing.assert_allclose(np.asarray(attn_out), np.asarray(ref_out),
                               rtol=2e-2, atol=2e-2)
    np.testing.assert_allclose(np.asarray(attn_w), np.asarray(ref_w),
                               rtol=2e-2, atol=2e-2)
    assert attn_out.shape == (B, L, E) and attn_w.shape == (B, L, L)

    print("KERNEL_OK")
</pallas_src>

<mosaic_0001>
module attributes {stable_mosaic.version = 11 : i64} {
  func.func @_attn_core_kernel(%arg0: i32, %arg1: i32, %arg2: memref<1x4x8x8xbf16, #tpu.memory_space<vmem>>, %arg3: memref<1x4x8x128xbf16, #tpu.memory_space<vmem>>, %arg4: memref<1x4x128x8xbf16, #tpu.memory_space<vmem>>, %arg5: memref<1x1x128xf32, #tpu.memory_space<vmem>>, %arg6: memref<1x4x8x8xbf16, #tpu.memory_space<vmem>>, %arg7: memref<1x8x128xf32, #tpu.memory_space<vmem>>) attributes {dimension_semantics = [#tpu.dimension_semantics<parallel>, #tpu.dimension_semantics<parallel>], iteration_bounds = array<i64: 2, 1>, scalar_prefetch = 0 : i64, scratch_operands = 0 : i64, tpu.core_type = #tpu.core_type<tc>, window_params = [{transform_indices = @transform_0, window_bounds = array<i64: 1, 4, 8, 8>}, {transform_indices = @transform_1, window_bounds = array<i64: 1, 4, 8, 128>}, {transform_indices = @transform_2, window_bounds = array<i64: 1, 4, 128, 8>}, {transform_indices = @transform_3, window_bounds = array<i64: 1, 1, 128>}, {transform_indices = @transform_4, window_bounds = array<i64: 1, 4, 8, 8>}, {transform_indices = @transform_5, window_bounds = array<i64: 1, 8, 128>}]} {
    %c0 = arith.constant 0 : index
    %c0_0 = arith.constant 0 : index
    %c0_1 = arith.constant 0 : index
    %0 = vector.load %arg5[%c0, %c0_0, %c0_1] : memref<1x1x128xf32, #tpu.memory_space<vmem>>, vector<1x1x128xf32>
    %1 = vector.shape_cast %0 : vector<1x1x128xf32> to vector<1x128xf32>
    %cst = arith.constant 0.000000e+00 : f32
    %2 = vector.broadcast %cst : f32 to vector<8x128xf32>
    %c0_i32 = arith.constant 0 : i32
    %c4_i32 = arith.constant 4 : i32
    %3 = arith.muli %c0_i32, %c4_i32 : i32
    %4 = tpu.assume_multiple %3, 4 : i32
    %c0_2 = arith.constant 0 : index
    %5 = arith.index_cast %4 : i32 to index
    %c0_3 = arith.constant 0 : index
    %c0_4 = arith.constant 0 : index
    %6 = vector.load %arg2[%c0_2, %5, %c0_3, %c0_4] : memref<1x4x8x8xbf16, #tpu.memory_space<vmem>>, vector<1x4x8x8xbf16>
    %7 = vector.shape_cast %6 : vector<1x4x8x8xbf16> to vector<4x8x8xbf16>
    %c0_5 = arith.constant 0 : index
    %8 = arith.index_cast %4 : i32 to index
    %c0_6 = arith.constant 0 : index
    %c0_7 = arith.constant 0 : index
    %9 = vector.load %arg3[%c0_5, %8, %c0_6, %c0_7] : memref<1x4x8x128xbf16, #tpu.memory_space<vmem>>, vector<1x4x8x128xbf16>
    %10 = vector.shape_cast %9 : vector<1x4x8x128xbf16> to vector<4x8x128xbf16>
    %c0_8 = arith.constant 0 : index
    %11 = arith.index_cast %4 : i32 to index
    %c0_9 = arith.constant 0 : index
    %c0_10 = arith.constant 0 : index
    %12 = vector.load %arg4[%c0_8, %11, %c0_9, %c0_10] : memref<1x4x128x8xbf16, #tpu.memory_space<vmem>>, vector<1x4x128x8xbf16>
    %13 = vector.shape_cast %12 : vector<1x4x128x8xbf16> to vector<4x128x8xbf16>
    "tpu.trace_start"() <{level = 10 : i32, message = "gld,gds->gls"}> : () -> ()
    %cst_11 = arith.constant dense<0.000000e+00> : vector<4x8x128xf32>
    %14 = tpu.matmul %7, %10, %cst_11 {dimension_numbers = #tpu.dot_dimension_numbers<[2], [1], [1], [2], [0, 0, 0, 1, 1, 2], [0], [0]>} : vector<4x8x8xbf16>, vector<4x8x128xbf16>, vector<4x8x128xf32> -> vector<4x8x128xf32>
    "tpu.trace_stop"() : () -> ()
    %15 = vector.shape_cast %1 : vector<1x128xf32> to vector<1x1x128xf32>
    %16 = vector.broadcast %15 : vector<1x1x128xf32> to vector<4x8x128xf32>
    %17 = arith.addf %14, %16 : vector<4x8x128xf32>
    %cst_12 = arith.constant dense<0xFF800000> : vector<4x8xf32>
    %18 = vector.multi_reduction <maximumf>, %17, %cst_12 [2] : vector<4x8x128xf32> to vector<4x8xf32>
    %19 = vector.shape_cast %18 : vector<4x8xf32> to vector<4x8x1xf32>
    %20 = vector.broadcast %19 : vector<4x8x1xf32> to vector<4x8x128xf32>
    %21 = arith.subf %17, %20 : vector<4x8x128xf32>
    %22 = math.exp %21 : vector<4x8x128xf32>
    %cst_13 = arith.constant dense<0.000000e+00> : vector<4x8xf32>
    %23 = vector.multi_reduction <add>, %22, %cst_13 [2] : vector<4x8x128xf32> to vector<4x8xf32>
    %24 = vector.shape_cast %23 : vector<4x8xf32> to vector<4x8x1xf32>
    %25 = tpu.reciprocal %24 {approx = true} : vector<4x8x1xf32> -> vector<4x8x1xf32>
    %26 = vector.broadcast %25 : vector<4x8x1xf32> to vector<4x8x128xf32>
    %27 = arith.mulf %22, %26 : vector<4x8x128xf32>
    %28 = arith.truncf %27 : vector<4x8x128xf32> to vector<4x8x128xbf16>
    "tpu.trace_start"() <{level = 10 : i32, message = "gls,gsd->gld"}> : () -> ()
    %cst_14 = arith.constant dense<0.000000e+00> : vector<4x8x8xf32>
    %29 = tpu.matmul %28, %13, %cst_14 {dimension_numbers = #tpu.dot_dimension_numbers<[2], [1], [1], [2], [0, 0, 0, 1, 1, 2], [0], [0]>} : vector<4x8x128xbf16>, vector<4x128x8xbf16>, vector<4x8x8xf32> -> vector<4x8x8xf32>
    "tpu.trace_stop"() : () -> ()
    %30 = arith.truncf %29 : vector<4x8x8xf32> to vector<4x8x8xbf16>
    %c0_15 = arith.constant 0 : index
    %31 = arith.index_cast %4 : i32 to index
    %c0_16 = arith.constant 0 : index
    %c0_17 = arith.constant 0 : index
    %32 = vector.load %arg6[%c0_15, %31, %c0_16, %c0_17] : memref<1x4x8x8xbf16, #tpu.memory_space<vmem>>, vector<1x4x8x8xbf16>
    %33 = vector.shape_cast %32 : vector<1x4x8x8xbf16> to vector<4x8x8xbf16>
    %34 = vector.shape_cast %30 : vector<4x8x8xbf16> to vector<1x4x8x8xbf16>
    tpu.vector_store %arg6[%c0_15, %31, %c0_16, %c0_17], %34 {strides = array<i32>} : memref<1x4x8x8xbf16, #tpu.memory_space<vmem>>, vector<1x4x8x8xbf16>,
    %cst_18 = arith.constant dense<0.000000e+00> : vector<8x128xf32>
    %35 = vector.multi_reduction <add>, %27, %cst_18 [0] : vector<4x8x128xf32> to vector<8x128xf32>
    %36 = arith.addf %2, %35 : vector<8x128xf32>
    %c1_i32 = arith.constant 1 : i32
    %cst_19 = arith.constant 2.500000e-01 : f32
    %37 = vector.broadcast %cst_19 : f32 to vector<8x128xf32>
    %38 = arith.mulf %36, %37 : vector<8x128xf32>
    %c0_20 = arith.constant 0 : index
    %c0_21 = arith.constant 0 : index
    %c0_22 = arith.constant 0 : index
    %39 = vector.load %arg7[%c0_20, %c0_21, %c0_22] : memref<1x8x128xf32, #tpu.memory_space<vmem>>, vector<1x8x128xf32>
    %40 = vector.shape_cast %39 : vector<1x8x128xf32> to vector<8x128xf32>
    %41 = vector.shape_cast %38 : vector<8x128xf32> to vector<1x8x128xf32>
    tpu.vector_store %arg7[%c0_20, %c0_21, %c0_22], %41 {strides = array<i32>} : memref<1x8x128xf32, #tpu.memory_space<vmem>>, vector<1x8x128xf32>,
    return
  }
  func.func @transform_0(%arg0: i32, %arg1: i32) -> (i32, i32, i32, i32) {
    %c0_i32 = arith.constant 0 : i32
    %c0_i32_0 = arith.constant 0 : i32
    %c0_i32_1 = arith.constant 0 : i32
    return %arg0, %c0_i32, %arg1, %c0_i32_0 : i32, i32, i32, i32
  }
  func.func @transform_1(%arg0: i32, %arg1: i32) -> (i32, i32, i32, i32) {
    %c0_i32 = arith.constant 0 : i32
    %c0_i32_0 = arith.constant 0 : i32
    %c0_i32_1 = arith.constant 0 : i32
    %c0_i32_2 = arith.constant 0 : i32
    return %arg0, %c0_i32, %c0_i32_0, %c0_i32_1 : i32, i32, i32, i32
  }
  func.func @transform_2(%arg0: i32, %arg1: i32) -> (i32, i32, i32, i32) {
    %c0_i32 = arith.constant 0 : i32
    %c0_i32_0 = arith.constant 0 : i32
    %c0_i32_1 = arith.constant 0 : i32
    %c0_i32_2 = arith.constant 0 : i32
    return %arg0, %c0_i32, %c0_i32_0, %c0_i32_1 : i32, i32, i32, i32
  }
  func.func @transform_3(%arg0: i32, %arg1: i32) -> (i32, i32, i32) {
    %c0_i32 = arith.constant 0 : i32
    %c0_i32_0 = arith.constant 0 : i32
    %c0_i32_1 = arith.constant 0 : i32
    return %arg0, %c0_i32, %c0_i32_0 : i32, i32, i32
  }
  func.func @transform_4(%arg0: i32, %arg1: i32) -> (i32, i32, i32, i32) {
    %c0_i32 = arith.constant 0 : i32
    %c0_i32_0 = arith.constant 0 : i32
    %c0_i32_1 = arith.constant 0 : i32
    return %arg0, %c0_i32, %arg1, %c0_i32_0 : i32, i32, i32, i32
  }
  func.func @transform_5(%arg0: i32, %arg1: i32) -> (i32, i32, i32) {
    %c0_i32 = arith.constant 0 : i32
    %c0_i32_0 = arith.constant 0 : i32
    return %arg0, %arg1, %c0_i32 : i32, i32, i32
  }
}

</mosaic_0001>

<llo_original>
// kernel: tpu_custom_call.1
$region0: #{tpu_custom_call.1}
  #allocation0 [shape = 'u32[]', space=smem, size = 0x4, offset = 0x4, fixed_abs, tag = 'smem constant byte address 0x4 - core index']
  #allocation1 [shape = 'u32[72,128]{1,0:T(1,128)}', space=vmem, size = 0x9000, scoped, tag = 'internal scratch']
  %s0 = inlined_call_operand.vmem [shape: bf16[2,4,8,8], index: 0, kind: input, shape index: {}]
  %s1 = inlined_call_operand.vmem [shape: bf16[2,4,8,128], index: 1, kind: input, shape index: {}]
  %s2 = inlined_call_operand.vmem [shape: bf16[2,4,128,8], index: 2, kind: input, shape index: {}]
  %s3 = inlined_call_operand.vmem [shape: f32[2,1,128], index: 3, kind: input, shape index: {}]
  %s4 = inlined_call_operand.hbm [shape: bf16[2,4,8,8], index: 4, kind: output, shape index: {0}]
  %s5 = inlined_call_operand.hbm [shape: f32[2,8,128], index: 5, kind: output, shape index: {1}]
  %6 = xla_tuple %s4, %s5
  %s7 = sld [smem:[#allocation0]]
  $region57: #{tpu_custom_call.1} parent=0
    _
  %s9 = ssub.s32 1, %s7
  %s10 = scalar_select 0, %s9, %s7
  $region1: #{tpu_custom_call.1} parent=0
    #allocation2 [shape = 'u8[16384]{0}', space=vmem, size = 0x4000, scoped, tag = 'output window, operand 0']
    #allocation3 [shape = 's32[2]{0}', space=sflag, size = 0x8, scoped, tag = 'scoped memory for tpu_custom_call.1']
    #allocation4 [shape = 'u8[8192]{0}', space=vmem, size = 0x2000, scoped, tag = 'output window, operand 1']
    #allocation5 [shape = 's32[2]{0}', space=sflag, size = 0x8, scoped, tag = 'scoped memory for tpu_custom_call.1']
    %11 = vsyncpa [#allocation3], 0
    %s12 = scalar_lea.sflag [#allocation3], 1
    %13 = vsyncpa %s12, 0
    %14 = vsyncpa [#allocation5], 0
    %s15 = scalar_lea.sflag [#allocation5], 1
    %16 = vsyncpa %s15, 0
    loop: start=0, step=1, limit=4
    $region2: #{tpu_custom_call.1} parent=1 // loop_pre_header
      _
    $region3: #{tpu_custom_call.1} parent=1 // loop_header
      %s18 = sphi 0, %s22
      %p19 = scmp.ge.s32.totalorder %s18, 4
      %s25 = sphi 0, %s37
      %s26 = sphi 0, %s33
      %s27 = sphi 0, %s25
      %s28 = sphi 0, %s26
      %s29 = sphi 0, %s27
      %s30 = sphi 0, %s28
      %s42 = sphi 0, %s44
      %s45 = sphi 0, %s42
      %s46 = sphi 0, %s45
      %s62 = sphi 0, %s46
      %s68 = sphi 0, %s70
      %s71 = sphi 0, %s68
      %s72 = sphi 0, %s71
      %s88 = sphi 0, %s72
      %s94 = sphi 0, %s96
      %s97 = sphi 0, %s94
      %s98 = sphi 0, %s97
      %s114 = sphi 0, %s98
      %s120 = sphi 0, %s122
      %s123 = sphi 0, %s120
      %s124 = sphi 0, %s123
      %s140 = sphi 0, %s124
      %s148 = sphi 0, %s150
      %s151 = sphi 0, %s148
      %s152 = sphi 0, %s151
      %s168 = sphi 0, %s152
      %s176 = sphi 0, %s178
      %s179 = sphi 0, %s176
      %s180 = sphi 0, %s179
      %s196 = sphi 0, %s180
    $region4: #{tpu_custom_call.1} parent=1 // loop_header_branch
      %21 = sbr.rel (%p19) target = $region8
    $region5: #{tpu_custom_call.1} parent=1 // loop_body
      %s23 = ssub.s32 %s18, 1
      %s24 = ssub.s32 %s18, 2
      %s31 = sadd.s32 1, %s26
      %p32 = scmp.ge.s32.totalorder %s31, 1
      %s33 = scalar_select %p32, 0, %s31
      %s34 = sadd.s32 1, %s25
      %s35 = scalar_select %p32, %s34, %s25
      %p36 = scmp.ge.s32.totalorder %s35, 2
      %s37 = scalar_select %p36, 0, %s35
      %s38 = ssub.s32 %s25, %s37
      %s39 = ssub.s32 %s26, %s33
      %s40 = sor.u32 %s38, %s39
      %p41 = scmp.eq.s32.totalorder %s40, 0
      %s43 = sadd.s32 %s42, 1
      %s44 = scalar_select %p41, %s42, %s43
      %p47 = pneg %p41
      %p48 = scmp.eq.s32.totalorder %s18, 1
      %p49 = por %p47, %p48
      %p50 = scmp.ne.s32.totalorder %s42, %s45
      %p51 = scmp.eq.s32.totalorder %s18, 0
      %p52 = por %p50, %p51
      %p53 = scmp.ne.s32.totalorder %s42, %s45
      %p54 = scmp.eq.s32.totalorder %s23, 1
      %p55 = por %p53, %p54
      %p56 = scmp.ne.s32.totalorder %s45, %s46
      %p57 = scmp.eq.s32.totalorder %s23, 0
      %p58 = por %p56, %p57
      %p59 = scmp.ne.s32.totalorder %s45, %s46
      %p60 = scmp.eq.s32.totalorder %s24, 1
      %p61 = por %p59, %p60
      %p63 = scmp.ne.s32.totalorder %s46, %s62
      %p64 = scmp.eq.s32.totalorder %s24, 0
      %p65 = por %p63, %p64
      %s66 = ssub.s32 %s25, %s37
      %p67 = scmp.eq.s32.totalorder %s66, 0
      %s69 = sadd.s32 %s68, 1
      %s70 = scalar_select %p67, %s68, %s69
      %p73 = pneg %p67
      %p74 = scmp.eq.s32.totalorder %s18, 1
      %p75 = por %p73, %p74
      %p76 = scmp.ne.s32.totalorder %s68, %s71
      %p77 = scmp.eq.s32.totalorder %s18, 0
      %p78 = por %p76, %p77
      %p79 = scmp.ne.s32.totalorder %s68, %s71
      %p80 = scmp.eq.s32.totalorder %s23, 1
      %p81 = por %p79, %p80
      %p82 = scmp.ne.s32.totalorder %s71, %s72
      %p83 = scmp.eq.s32.totalorder %s23, 0
      %p84 = por %p82, %p83
      %p85 = scmp.ne.s32.totalorder %s71, %s72
      %p86 = scmp.eq.s32.totalorder %s24, 1
      %p87 = por %p85, %p86
      %p89 = scmp.ne.s32.totalorder %s72, %s88
      %p90 = scmp.eq.s32.totalorder %s24, 0
      %p91 = por %p89, %p90
      %s92 = ssub.s32 %s25, %s37
      %p93 = scmp.eq.s32.totalorder %s92, 0
      %s95 = sadd.s32 %s94, 1
      %s96 = scalar_select %p93, %s94, %s95
      %p99 = pneg %p93
      %p100 = scmp.eq.s32.totalorder %s18, 1
      %p101 = por %p99, %p100
      %p102 = scmp.ne.s32.totalorder %s94, %s97
      %p103 = scmp.eq.s32.totalorder %s18, 0
      %p104 = por %p102, %p103
      %p105 = scmp.ne.s32.totalorder %s94, %s97
      %p106 = scmp.eq.s32.totalorder %s23, 1
      %p107 = por %p105, %p106
      %p108 = scmp.ne.s32.totalorder %s97, %s98
      %p109 = scmp.eq.s32.totalorder %s23, 0
      %p110 = por %p108, %p109
      %p111 = scmp.ne.s32.totalorder %s97, %s98
      %p112 = scmp.eq.s32.totalorder %s24, 1
      %p113 = por %p111, %p112
      %p115 = scmp.ne.s32.totalorder %s98, %s114
      %p116 = scmp.eq.s32.totalorder %s24, 0
      %p117 = por %p115, %p116
      %s118 = ssub.s32 %s25, %s37
      %p119 = scmp.eq.s32.totalorder %s118, 0
      %s121 = sadd.s32 %s120, 1
      %s122 = scalar_select %p119, %s120, %s121
      %p125 = pneg %p119
      %p126 = scmp.eq.s32.totalorder %s18, 1
      %p127 = por %p125, %p126
      %p128 = scmp.ne.s32.totalorder %s120, %s123
      %p129 = scmp.eq.s32.totalorder %s18, 0
      %p130 = por %p128, %p129
      %p131 = scmp.ne.s32.totalorder %s120, %s123
      %p132 = scmp.eq.s32.totalorder %s23, 1
      %p133 = por %p131, %p132
      %p134 = scmp.ne.s32.totalorder %s123, %s124
      %p135 = scmp.eq.s32.totalorder %s23, 0
      %p136 = por %p134, %p135
      %p137 = scmp.ne.s32.totalorder %s123, %s124
      %p138 = scmp.eq.s32.totalorder %s24, 1
      %p139 = por %p137, %p138
      %p141 = scmp.ne.s32.totalorder %s124, %s140
      %p142 = scmp.eq.s32.totalorder %s24, 0
      %p143 = por %p141, %p142
      %s144 = ssub.s32 %s25, %s37
      %s145 = ssub.s32 %s26, %s33
      %s146 = sor.u32 %s144, %s145
      %p147 = scmp.eq.s32.totalorder %s146, 0
      %s149 = sadd.s32 %s148, 1
      %s150 = scalar_select %p147, %s148, %s149
      %p153 = pneg %p147
      %p154 = scmp.eq.s32.totalorder %s18, 1
      %p155 = por %p153, %p154
      %p156 = scmp.ne.s32.totalorder %s148, %s151
      %p157 = scmp.eq.s32.totalorder %s18, 0
      %p158 = por %p156, %p157
      %p159 = scmp.ne.s32.totalorder %s148, %s151
      %p160 = scmp.eq.s32.totalorder %s23, 1
      %p161 = por %p159, %p160
      %p162 = scmp.ne.s32.totalorder %s151, %s152
      %p163 = scmp.eq.s32.totalorder %s23, 0
      %p164 = por %p162, %p163
      %p165 = scmp.ne.s32.totalorder %s151, %s152
      %p166 = scmp.eq.s32.totalorder %s24, 1
      %p167 = por %p165, %p166
      %p169 = scmp.ne.s32.totalorder %s152, %s168
      %p170 = scmp.eq.s32.totalorder %s24, 0
      %p171 = por %p169, %p170
      %s172 = ssub.s32 %s25, %s37
      %s173 = ssub.s32 %s26, %s33
      %s174 = sor.u32 %s172, %s173
      %p175 = scmp.eq.s32.totalorder %s174, 0
      %s177 = sadd.s32 %s176, 1
      %s178 = scalar_select %p175, %s176, %s177
      %p181 = pneg %p175
      %p182 = scmp.eq.s32.totalorder %s18, 1
      %p183 = por %p181, %p182
      %p184 = scmp.ne.s32.totalorder %s176, %s179
      %p185 = scmp.eq.s32.totalorder %s18, 0
      %p186 = por %p184, %p185
      %p187 = scmp.ne.s32.totalorder %s176, %s179
      %p188 = scmp.eq.s32.totalorder %s23, 1
      %p189 = por %p187, %p188
      %p190 = scmp.ne.s32.totalorder %s179, %s180
      %p191 = scmp.eq.s32.totalorder %s23, 0
      %p192 = por %p190, %p191
      %p193 = scmp.ne.s32.totalorder %s179, %s180
      %p194 = scmp.eq.s32.totalorder %s24, 1
      %p195 = por %p193, %p194
      %p197 = scmp.ne.s32.totalorder %s180, %s196
      %p198 = scmp.eq.s32.totalorder %s24, 0
      %p199 = por %p197, %p198
      %p200 = scmp.le.s32.totalorder 1, %s18
      %p201 = scmp.lt.s32.totalorder %s18, 3
      %p202 = pnand %p200, %p201
      %p203 = pneg %p202
      // Predicated region
      $region9: #{tpu_custom_call.1} parent=5 // pred_check
        _
      $region10: #{tpu_custom_call.1} parent=5 // pred_check_branch
        %205 = sbr.rel (%p202) target = $region12
      $region11: #{tpu_custom_call.1} parent=5 // pred_region
        %s206 = ssub.s32 %s18, 1
      $region12: #{tpu_custom_call.1} parent=5 // pred_fallthru
        _
      %p207 = scmp.lt.s32.totalorder %s18, 2
      // Predicated region
      $region13: #{tpu_custom_call.1} parent=5 // pred_check
        %p208 = pneg %p207
      $region14: #{tpu_custom_call.1} parent=5 // pred_check_branch
        %210 = sbr.rel (%p208) target = $region16
      $region15: #{tpu_custom_call.1} parent=5 // pred_region
        // Predicated region
        $region17: #{tpu_custom_call.1} parent=15 // pred_check
          %p211 = pneg %p52
        $region18: #{tpu_custom_call.1} parent=15 // pred_check_branch
          %213 = sbr.rel (%p211) target = $region20
        $region19: #{tpu_custom_call.1} parent=15 // pred_region
          %p214 = scmp.lt.s32.totalorder %s25, 1
          %s215 = scalar_select %p214, %s25, 1
          %p216 = scmp.lt.s32.totalorder %s26, 0
          %s217 = scalar_select %p216, %s26, 0
          %s218 = smul.addr %s215, 4
          %s219 = sadd.s32 %s217, %s218
          %s220 = smul.addr %s219, 4
          %s221 = scalar_lea.vmem %s0, %s220
        $region20: #{tpu_custom_call.1} parent=15 // pred_fallthru
          _
        // Predicated region
        $region21: #{tpu_custom_call.1} parent=15 // pred_check
          %p222 = pneg %p78
        $region22: #{tpu_custom_call.1} parent=15 // pred_check_branch
          %224 = sbr.rel (%p222) target = $region24
        $region23: #{tpu_custom_call.1} parent=15 // pred_region
          %p225 = scmp.lt.s32.totalorder %s25, 1
          %s226 = scalar_select %p225, %s25, 1
          %s227 = smul.addr %s226, 4
          %s228 = smul.addr %s227, 4
          %s229 = scalar_lea.vmem %s1, %s228
        $region24: #{tpu_custom_call.1} parent=15 // pred_fallthru
          _
        // Predicated region
        $region25: #{tpu_custom_call.1} parent=15 // pred_check
          %p230 = pneg %p104
        $region26: #{tpu_custom_call.1} parent=15 // pred_check_branch
          %232 = sbr.rel (%p230) target = $region28
        $region27: #{tpu_custom_call.1} parent=15 // pred_region
          %p233 = scmp.lt.s32.totalorder %s25, 1
          %s234 = scalar_select %p233, %s25, 1
          %s235 = smul.addr %s234, 64
          %s236 = smul.addr %s235, 4
          %s237 = scalar_lea.vmem %s2, %s236
        $region28: #{tpu_custom_call.1} parent=15 // pred_fallthru
          _
        // Predicated region
        $region29: #{tpu_custom_call.1} parent=15 // pred_check
          %p238 = pneg %p130
        $region30: #{tpu_custom_call.1} parent=15 // pred_check_branch
          %240 = sbr.rel (%p238) target = $region32
        $region31: #{tpu_custom_call.1} parent=15 // pred_region
          %p241 = scmp.lt.s32.totalorder %s25, 1
          %s242 = scalar_select %p241, %s25, 1
          %s243 = scalar_lea.vmem %s3, %s242
        $region32: #{tpu_custom_call.1} parent=15 // pred_fallthru
          _
      $region16: #{tpu_custom_call.1} parent=5 // pred_fallthru
        _
      %p244 = scmp.le.s32.totalorder 1, %s18
      %p245 = scmp.lt.s32.totalorder %s18, 3
      %p246 = pnand %p244, %p245
      %p247 = pneg %p246
      // Predicated region
      $region33: #{tpu_custom_call.1} parent=5 // pred_check
        _
      $region34: #{tpu_custom_call.1} parent=5 // pred_check_branch
        %249 = sbr.rel (%p246) target = $region36
      $region35: #{tpu_custom_call.1} parent=5 // pred_region
        %s250 = ssub.s32 %s18, 1
        %p251 = scmp.lt.s32.totalorder %s27, 1
        %s252 = scalar_select %p251, %s27, 1
        %p253 = scmp.lt.s32.totalorder %s28, 0
        %s254 = scalar_select %p253, %s28, 0
        %s255 = smul.addr %s252, 4
        %s256 = sadd.s32 %s254, %s255
        %s257 = smul.addr %s256, 4
        %s258 = scalar_lea.vmem %s0, %s257
        %p259 = pneg %p58
        %p260 = pneg %p55
        %p261 = scmp.lt.s32.totalorder %s27, 1
        %s262 = scalar_select %p261, %s27, 1
        %s263 = smul.addr %s262, 4
        %s264 = smul.addr %s263, 4
        %s265 = scalar_lea.vmem %s1, %s264
        %p266 = pneg %p84
        %p267 = pneg %p81
        %p268 = scmp.lt.s32.totalorder %s27, 1
        %s269 = scalar_select %p268, %s27, 1
        %s270 = smul.addr %s269, 64
        %s271 = smul.addr %s270, 4
        %s272 = scalar_lea.vmem %s2, %s271
        %p273 = pneg %p110
        %p274 = pneg %p107
        %p275 = scmp.lt.s32.totalorder %s27, 1
        %s276 = scalar_select %p275, %s27, 1
        %s277 = scalar_lea.vmem %s3, %s276
        %p278 = pneg %p136
        %p279 = pneg %p133
        %p280 = pneg %p164
        %p281 = pneg %p161
        %s282 = sand.u32 %s151, 1
        %s283 = scalar_lea.sflag [#allocation3], %s282
        %s284 = sand.u32 %s151, 1
        %s285 = smul.addr %s284, 16
        %s286 = scalar_lea.vmem [#allocation2], %s285
        %p287 = pneg %p192
        %p288 = pneg %p189
        %s289 = sand.u32 %s179, 1
        %s290 = scalar_lea.sflag [#allocation5], %s289
        %s291 = sand.u32 %s179, 1
        %s292 = smul.addr %s291, 8
        %s293 = scalar_lea.vmem [#allocation4], %s292
        %p294 = scmp.lt.s32.totalorder %s27, 1
        %s295 = scalar_select %p294, %s27, 1
        %p296 = scmp.lt.s32.totalorder %s28, 0
        %s297 = scalar_select %p296, %s28, 0
        %s298 = smul.addr %s295, 4
        %s299 = sadd.s32 %s297, %s298
        %s300 = smul.addr %s299, 4
        %s301 = scalar_lea.vmem %s0, %s300
        %p302 = scmp.lt.s32.totalorder %s27, 1
        %s303 = scalar_select %p302, %s27, 1
        %s304 = smul.addr %s303, 4
        %s305 = smul.addr %s304, 4
        %s306 = scalar_lea.vmem %s1, %s305
        %p307 = scmp.lt.s32.totalorder %s27, 1
        %s308 = scalar_select %p307, %s27, 1
        %s309 = smul.addr %s308, 64
        %s310 = smul.addr %s309, 4
        %s311 = scalar_lea.vmem %s2, %s310
        %p312 = scmp.lt.s32.totalorder %s27, 1
        %s313 = scalar_select %p312, %s27, 1
        %s314 = scalar_lea.vmem %s3, %s313
        %v316 = vld [vmem:[%s314] sm:$0x1]
        %v317 = vld [vmem:[%s301] sm:$0xf]
        %v318 = vld [vmem:[%s301 + $0x4] sm:$0xf]
        %v319 = vld [vmem:[%s301 + $0x8] sm:$0xf]
        %v320 = vld [vmem:[%s301 + $0xc] sm:$0xf]
        %v321 = vld [vmem:[%s306] sm:$0xf]
        %v322 = vld [vmem:[%s306 + $0x4] sm:$0xf]
        %v323 = vld [vmem:[%s306 + $0x8] sm:$0xf]
        %v324 = vld [vmem:[%s306 + $0xc] sm:$0xf]
        %s325 = smul.u32 0, 16
        %s326 = smul.addr %s325, 4
        %s327 = scalar_lea.vmem %s311, %s326
        %v328 = vld [vmem:[%s327] sm:$0xf]
        %v329 = vld [vmem:[%s327 + $0x4] sm:$0xf]
        %v330 = vld [vmem:[%s327 + $0x8] sm:$0xf]
        %v331 = vld [vmem:[%s327 + $0xc] sm:$0xf]
        %v332 = vld [vmem:[%s327 + $0x10] sm:$0xf]
        %v333 = vld [vmem:[%s327 + $0x14] sm:$0xf]
        %v334 = vld [vmem:[%s327 + $0x18] sm:$0xf]
        %v335 = vld [vmem:[%s327 + $0x1c] sm:$0xf]
        %v336 = vld [vmem:[%s327 + $0x20] sm:$0xf]
        %v337 = vld [vmem:[%s327 + $0x24] sm:$0xf]
        %v338 = vld [vmem:[%s327 + $0x28] sm:$0xf]
        %v339 = vld [vmem:[%s327 + $0x2c] sm:$0xf]
        %v340 = vld [vmem:[%s327 + $0x30] sm:$0xf]
        %v341 = vld [vmem:[%s327 + $0x34] sm:$0xf]
        %v342 = vld [vmem:[%s327 + $0x38] sm:$0xf]
        %v343 = vld [vmem:[%s327 + $0x3c] sm:$0xf]
        %v344 = vld [vmem:[%s327 + $0x40] sm:$0xf]
        %v345 = vld [vmem:[%s327 + $0x44] sm:$0xf]
        %v346 = vld [vmem:[%s327 + $0x48] sm:$0xf]
        %v347 = vld [vmem:[%s327 + $0x4c] sm:$0xf]
        %v348 = vld [vmem:[%s327 + $0x50] sm:$0xf]
        %v349 = vld [vmem:[%s327 + $0x54] sm:$0xf]
        %v350 = vld [vmem:[%s327 + $0x58] sm:$0xf]
        %v351 = vld [vmem:[%s327 + $0x5c] sm:$0xf]
        %v352 = vld [vmem:[%s327 + $0x60] sm:$0xf]
        %v353 = vld [vmem:[%s327 + $0x64] sm:$0xf]
        %v354 = vld [vmem:[%s327 + $0x68] sm:$0xf]
        %v355 = vld [vmem:[%s327 + $0x6c] sm:$0xf]
        %v356 = vld [vmem:[%s327 + $0x70] sm:$0xf]
        %v357 = vld [vmem:[%s327 + $0x74] sm:$0xf]
        %v358 = vld [vmem:[%s327 + $0x78] sm:$0xf]
        %v359 = vld [vmem:[%s327 + $0x7c] sm:$0xf]
        %v360 = vld [vmem:[%s327 + $0x80] sm:$0xf]
        %v361 = vld [vmem:[%s327 + $0x84] sm:$0xf]
        %v362 = vld [vmem:[%s327 + $0x88] sm:$0xf]
        %v363 = vld [vmem:[%s327 + $0x8c] sm:$0xf]
        %v364 = vld [vmem:[%s327 + $0x90] sm:$0xf]
        %v365 = vld [vmem:[%s327 + $0x94] sm:$0xf]
        %v366 = vld [vmem:[%s327 + $0x98] sm:$0xf]
        %v367 = vld [vmem:[%s327 + $0x9c] sm:$0xf]
        %v368 = vld [vmem:[%s327 + $0xa0] sm:$0xf]
        %v369 = vld [vmem:[%s327 + $0xa4] sm:$0xf]
        %v370 = vld [vmem:[%s327 + $0xa8] sm:$0xf]
        %v371 = vld [vmem:[%s327 + $0xac] sm:$0xf]
        %v372 = vld [vmem:[%s327 + $0xb0] sm:$0xf]
        %v373 = vld [vmem:[%s327 + $0xb4] sm:$0xf]
        %v374 = vld [vmem:[%s327 + $0xb8] sm:$0xf]
        %v375 = vld [vmem:[%s327 + $0xbc] sm:$0xf]
        %v376 = vld [vmem:[%s327 + $0xc0] sm:$0xf]
        %v377 = vld [vmem:[%s327 + $0xc4] sm:$0xf]
        %v378 = vld [vmem:[%s327 + $0xc8] sm:$0xf]
        %v379 = vld [vmem:[%s327 + $0xcc] sm:$0xf]
        %v380 = vld [vmem:[%s327 + $0xd0] sm:$0xf]
        %v381 = vld [vmem:[%s327 + $0xd4] sm:$0xf]
        %v382 = vld [vmem:[%s327 + $0xd8] sm:$0xf]
        %v383 = vld [vmem:[%s327 + $0xdc] sm:$0xf]
        %v384 = vld [vmem:[%s327 + $0xe0] sm:$0xf]
        %v385 = vld [vmem:[%s327 + $0xe4] sm:$0xf]
        %v386 = vld [vmem:[%s327 + $0xe8] sm:$0xf]
        %v387 = vld [vmem:[%s327 + $0xec] sm:$0xf]
        %v388 = vld [vmem:[%s327 + $0xf0] sm:$0xf]
        %v389 = vld [vmem:[%s327 + $0xf4] sm:$0xf]
        %v390 = vld [vmem:[%s327 + $0xf8] sm:$0xf]
        %v391 = vld [vmem:[%s327 + $0xfc] sm:$0xf]
        %v393 = vperm.slane %v316, 0
        %vm395 = vcmask 64512
        %v397 = vsel %vm395, %v317, 0
        %vm399 = vcmask 1043456
        %v401 = vsel %vm399, %v321, 0
        %403 = vmatpush.bf16.msra.mxu0 0
        %404 = vmatpush.bf16.msra.mxu0 0
        %405 = vmatpush.bf16.msra.mxu0 0
        %406 = vmatpush.bf16.msra.mxu0 0
        %407 = vmatpush.bf16.msra.mxu0 0
        %408 = vmatpush.bf16.msra.mxu0 0
        %409 = vmatpush.bf16.msra.mxu0 0
        %410 = vmatpush.bf16.msra.mxu0 %v401
        %411 = vmatmul.bf16.gmra.mxu0 %v397
        %v412 = vpop.f32.mrf.mxu0
        %v413 = vadd.f32 %v393, %v412
        %v414 = vpop.f32.mrf.mxu0
        %415 = vdwg.mxu0
        %v417 = vsel %vm395, %v318, 0
        %v420 = vsel %vm399, %v322, 0
        %422 = vmatpush.bf16.msra.mxu0 0
        %423 = vmatpush.bf16.msra.mxu0 0
        %424 = vmatpush.bf16.msra.mxu0 0
        %425 = vmatpush.bf16.msra.mxu0 0
        %426 = vmatpush.bf16.msra.mxu0 0
        %427 = vmatpush.bf16.msra.mxu0 0
        %428 = vmatpush.bf16.msra.mxu0 0
        %429 = vmatpush.bf16.msra.mxu0 %v420
        %430 = vmatmul.bf16.gmra.mxu0 %v417
        %v431 = vpop.f32.mrf.mxu0
        %v432 = vadd.f32 %v393, %v431
        %v433 = vpop.f32.mrf.mxu0
        %434 = vdwg.mxu0
        %v436 = vsel %vm395, %v319, 0
        %v439 = vsel %vm399, %v323, 0
        %441 = vmatpush.bf16.msra.mxu0 0
        %442 = vmatpush.bf16.msra.mxu0 0
        %443 = vmatpush.bf16.msra.mxu0 0
        %444 = vmatpush.bf16.msra.mxu0 0
        %445 = vmatpush.bf16.msra.mxu0 0
        %446 = vmatpush.bf16.msra.mxu0 0
        %447 = vmatpush.bf16.msra.mxu0 0
        %448 = vmatpush.bf16.msra.mxu0 %v439
        %449 = vmatmul.bf16.gmra.mxu0 %v436
        %v450 = vpop.f32.mrf.mxu0
        %v451 = vadd.f32 %v393, %v450
        %v452 = vpop.f32.mrf.mxu0
        %453 = vdwg.mxu0
        %v455 = vsel %vm395, %v320, 0
        %v458 = vsel %vm399, %v324, 0
        %460 = vmatpush.bf16.msra.mxu0 0
        %461 = vmatpush.bf16.msra.mxu0 0
        %462 = vmatpush.bf16.msra.mxu0 0
        %463 = vmatpush.bf16.msra.mxu0 0
        %464 = vmatpush.bf16.msra.mxu0 0
        %465 = vmatpush.bf16.msra.mxu0 0
        %466 = vmatpush.bf16.msra.mxu0 0
        %467 = vmatpush.bf16.msra.mxu0 %v458
        %468 = vmatmul.bf16.gmra.mxu0 %v455
        %v469 = vpop.f32.mrf.mxu0
        %v470 = vadd.f32 %v393, %v469
        %v471 = vpop.f32.mrf.mxu0
        %472 = vdwg.mxu0
        %473 = vmax.xlane.f32.xlu0 %v413
        %v474 = vpop.xlane.xlu0 %473
        %475 = vmax.xlane.f32.xlu0 %v432
        %v476 = vpop.xlane.xlu0 %475
        %477 = vmax.xlane.f32.xlu0 %v451
        %v478 = vpop.xlane.xlu0 %477
        %479 = vmax.xlane.f32.xlu0 %v470
        %v480 = vpop.xlane.xlu0 %479
        %v481 = vsub.f32 %v413, %v474
        %v482 = vsub.f32 %v432, %v476
        %v483 = vsub.f32 %v451, %v478
        %v484 = vsub.f32 %v470, %v480
        %v485 = vmul.f32 %v481, 1.442695
        %v486 = vpow.pop %v485
        %v487 = vmul.f32 %v482, 1.442695
        %v488 = vpow.pop %v487
        %v489 = vmul.f32 %v483, 1.442695
        %v490 = vpow.pop %v489
        %v491 = vmul.f32 %v484, 1.442695
        %v492 = vpow.pop %v491
        %493 = vadd.xlane.f32.xlu0 %v486
        %v494 = vpop.xlane.xlu0 %493
        %495 = vadd.xlane.f32.xlu0 %v488
        %v496 = vpop.xlane.xlu0 %495
        %497 = vadd.xlane.f32.xlu0 %v490
        %v498 = vpop.xlane.xlu0 %497
        %499 = vadd.xlane.f32.xlu0 %v492
        %v500 = vpop.xlane.xlu0 %499
        %v501 = vrcp.pop %v494
        %v502 = vrcp.pop %v496
        %v503 = vrcp.pop %v498
        %v504 = vrcp.pop %v500
        %v505 = vmul.f32 %v486, %v501
        %v506 = vmul.f32 %v488, %v502
        %v507 = vmul.f32 %v490, %v503
        %v508 = vmul.f32 %v492, %v504
        %v509 = vpack.c.bf16 %v505, %v505
        %v510 = vpack.c.bf16 %v506, %v506
        %v511 = vpack.c.bf16 %v507, %v507
        %v512 = vpack.c.bf16 %v508, %v508
        %v529 = vunpack.c.l.b16 %v328
        %v530 = vunpack.c.l.b16 %v329
        %v531 = vunpack.c.l.b16 %v330
        %v532 = vunpack.c.l.b16 %v331
        %v533 = vunpack.c.l.b16 %v332
        %v534 = vunpack.c.l.b16 %v333
        %v535 = vunpack.c.l.b16 %v334
        %v536 = vunpack.c.l.b16 %v335
        %v537 = vunpack.c.l.b16 %v336
        %v538 = vunpack.c.l.b16 %v337
        %v539 = vunpack.c.l.b16 %v338
        %v540 = vunpack.c.l.b16 %v339
        %v541 = vunpack.c.l.b16 %v340
        %v542 = vunpack.c.l.b16 %v341
        %v543 = vunpack.c.l.b16 %v342
        %v544 = vunpack.c.l.b16 %v343
        %v545 = vpack.c.b16 %v530, %v529
        %v546 = vpack.c.b16 %v532, %v531
        %v547 = vpack.c.b16 %v534, %v533
        %v548 = vpack.c.b16 %v536, %v535
        %v549 = vpack.c.b16 %v538, %v537
        %v550 = vpack.c.b16 %v540, %v539
        %v551 = vpack.c.b16 %v542, %v541
        %v552 = vpack.c.b16 %v544, %v543
        %561 = vmatpush.bf16.msra.mxu0 %v552
        %562 = vmatpush.bf16.msra.mxu0 %v551
        %563 = vmatpush.bf16.msra.mxu0 %v550
        %564 = vmatpush.bf16.msra.mxu0 %v549
        %565 = vmatpush.bf16.msra.mxu0 %v548
        %566 = vmatpush.bf16.msra.mxu0 %v547
        %567 = vmatpush.bf16.msra.mxu0 %v546
        %568 = vmatpush.bf16.msra.mxu0 %v545
        %569 = vmatmul.bf16.gmra.mxu0 %v509
        %v570 = vpop.f32.mrf.mxu0
        %v571 = vadd.f32 0.0, %v570
        %v572 = vpop.f32.mrf.mxu0
        %573 = vdwg.mxu0
        %v590 = vunpack.c.l.b16 %v344
        %v591 = vunpack.c.l.b16 %v345
        %v592 = vunpack.c.l.b16 %v346
        %v593 = vunpack.c.l.b16 %v347
        %v594 = vunpack.c.l.b16 %v348
        %v595 = vunpack.c.l.b16 %v349
        %v596 = vunpack.c.l.b16 %v350
        %v597 = vunpack.c.l.b16 %v351
        %v598 = vunpack.c.l.b16 %v352
        %v599 = vunpack.c.l.b16 %v353
        %v600 = vunpack.c.l.b16 %v354
        %v601 = vunpack.c.l.b16 %v355
        %v602 = vunpack.c.l.b16 %v356
        %v603 = vunpack.c.l.b16 %v357
        %v604 = vunpack.c.l.b16 %v358
        %v605 = vunpack.c.l.b16 %v359
        %v606 = vpack.c.b16 %v591, %v590
        %v607 = vpack.c.b16 %v593, %v592
        %v608 = vpack.c.b16 %v595, %v594
        %v609 = vpack.c.b16 %v597, %v596
        %v610 = vpack.c.b16 %v599, %v598
        %v611 = vpack.c.b16 %v601, %v600
        %v612 = vpack.c.b16 %v603, %v602
        %v613 = vpack.c.b16 %v605, %v604
        %622 = vmatpush.bf16.msra.mxu0 %v613
        %623 = vmatpush.bf16.msra.mxu0 %v612
        %624 = vmatpush.bf16.msra.mxu0 %v611
        %625 = vmatpush.bf16.msra.mxu0 %v610
        %626 = vmatpush.bf16.msra.mxu0 %v609
        %627 = vmatpush.bf16.msra.mxu0 %v608
        %628 = vmatpush.bf16.msra.mxu0 %v607
        %629 = vmatpush.bf16.msra.mxu0 %v606
        %630 = vmatmul.bf16.gmra.mxu0 %v510
        %v631 = vpop.f32.mrf.mxu0
        %v632 = vadd.f32 0.0, %v631
        %v633 = vpop.f32.mrf.mxu0
        %634 = vdwg.mxu0
        %v651 = vunpack.c.l.b16 %v360
        %v652 = vunpack.c.l.b16 %v361
        %v653 = vunpack.c.l.b16 %v362
        %v654 = vunpack.c.l.b16 %v363
        %v655 = vunpack.c.l.b16 %v364
        %v656 = vunpack.c.l.b16 %v365
        %v657 = vunpack.c.l.b16 %v366
        %v658 = vunpack.c.l.b16 %v367
        %v659 = vunpack.c.l.b16 %v368
        %v660 = vunpack.c.l.b16 %v369
        %v661 = vunpack.c.l.b16 %v370
        %v662 = vunpack.c.l.b16 %v371
        %v663 = vunpack.c.l.b16 %v372
        %v664 = vunpack.c.l.b16 %v373
        %v665 = vunpack.c.l.b16 %v374
        %v666 = vunpack.c.l.b16 %v375
        %v667 = vpack.c.b16 %v652, %v651
        %v668 = vpack.c.b16 %v654, %v653
        %v669 = vpack.c.b16 %v656, %v655
        %v670 = vpack.c.b16 %v658, %v657
        %v671 = vpack.c.b16 %v660, %v659
        %v672 = vpack.c.b16 %v662, %v661
        %v673 = vpack.c.b16 %v664, %v663
        %v674 = vpack.c.b16 %v666, %v665
        %683 = vmatpush.bf16.msra.mxu0 %v674
        %684 = vmatpush.bf16.msra.mxu0 %v673
        %685 = vmatpush.bf16.msra.mxu0 %v672
        %686 = vmatpush.bf16.msra.mxu0 %v671
        %687 = vmatpush.bf16.msra.mxu0 %v670
        %688 = vmatpush.bf16.msra.mxu0 %v669
        %689 = vmatpush.bf16.msra.mxu0 %v668
        %690 = vmatpush.bf16.msra.mxu0 %v667
        %691 = vmatmul.bf16.gmra.mxu0 %v511
        %v692 = vpop.f32.mrf.mxu0
        %v693 = vadd.f32 0.0, %v692
        %v694 = vpop.f32.mrf.mxu0
        %695 = vdwg.mxu0
        %v712 = vunpack.c.l.b16 %v376
        %v713 = vunpack.c.l.b16 %v377
        %v714 = vunpack.c.l.b16 %v378
        %v715 = vunpack.c.l.b16 %v379
        %v716 = vunpack.c.l.b16 %v380
        %v717 = vunpack.c.l.b16 %v381
        %v718 = vunpack.c.l.b16 %v382
        %v719 = vunpack.c.l.b16 %v383
        %v720 = vunpack.c.l.b16 %v384
        %v721 = vunpack.c.l.b16 %v385
        %v722 = vunpack.c.l.b16 %v386
        %v723 = vunpack.c.l.b16 %v387
        %v724 = vunpack.c.l.b16 %v388
        %v725 = vunpack.c.l.b16 %v389
        %v726 = vunpack.c.l.b16 %v390
        %v727 = vunpack.c.l.b16 %v391
        %v728 = vpack.c.b16 %v713, %v712
        %v729 = vpack.c.b16 %v715, %v714
        %v730 = vpack.c.b16 %v717, %v716
        %v731 = vpack.c.b16 %v719, %v718
        %v732 = vpack.c.b16 %v721, %v720
        %v733 = vpack.c.b16 %v723, %v722
        %v734 = vpack.c.b16 %v725, %v724
        %v735 = vpack.c.b16 %v727, %v726
        %744 = vmatpush.bf16.msra.mxu0 %v735
        %745 = vmatpush.bf16.msra.mxu0 %v734
        %746 = vmatpush.bf16.msra.mxu0 %v733
        %747 = vmatpush.bf16.msra.mxu0 %v732
        %748 = vmatpush.bf16.msra.mxu0 %v731
        %749 = vmatpush.bf16.msra.mxu0 %v730
        %750 = vmatpush.bf16.msra.mxu0 %v729
        %751 = vmatpush.bf16.msra.mxu0 %v728
        %752 = vmatmul.bf16.gmra.mxu0 %v512
        %v753 = vpop.f32.mrf.mxu0
        %v754 = vadd.f32 0.0, %v753
        %v755 = vpop.f32.mrf.mxu0
        %756 = vdwg.mxu0
        %v757 = vpack.c.bf16 %v571, %v571
        %v758 = vpack.c.bf16 %v632, %v632
        %v759 = vpack.c.bf16 %v693, %v693
        %v760 = vpack.c.bf16 %v754, %v754
        %vm761 = vcmask 60416
        %762 = vst.msk [vmem:[%s286] sm:$0xf] %vm761, %v757
        %763 = vst.msk [vmem:[%s286 + $0x4] sm:$0xf] %vm761, %v758
        %764 = vst.msk [vmem:[%s286 + $0x8] sm:$0xf] %vm761, %v759
        %765 = vst.msk [vmem:[%s286 + $0xc] sm:$0xf] %vm761, %v760
        %v766 = vadd.f32 %v505, %v506
        %v767 = vadd.f32 %v766, %v507
        %v768 = vadd.f32 %v767, %v508
        %v769 = vadd.f32 %v768, 0.0
        %v770 = vmul.f32 %v769, 0.25
        %771 = vst [vmem:[%s293] sm:$0xff] %v770
        %s772 = sand.u32 %s151, 1
        %s773 = scalar_lea.sflag [#allocation3], %s772
        %s774 = sand.u32 %s151, 1
        %s775 = smul.addr %s774, 16
        %s776 = scalar_lea.vmem [#allocation2], %s775
        %s777 = sand.u32 %s179, 1
        %s778 = scalar_lea.sflag [#allocation5], %s777
        %s779 = sand.u32 %s179, 1
        %s780 = smul.addr %s779, 8
        %s781 = scalar_lea.vmem [#allocation4], %s780
        // Predicated region
        $region37: #{tpu_custom_call.1} parent=35 // pred_check
          %p782 = pneg %p161
        $region38: #{tpu_custom_call.1} parent=35 // pred_check_branch
          %784 = sbr.rel (%p782) target = $region40
        $region39: #{tpu_custom_call.1} parent=35 // pred_region
          %786 = vsyncadd %s773, 0
          %s787 = smul.addr %s27, 4
          %s788 = sadd.s32 %s28, %s787
          %s789 = smul.addr %s788, 4
          %s790 = scalar_lea.hbm %s4, %s789
          %s791 = sshll.u32 %s776, 4
          %s792 = int_to_ptr.vmem [resolvable:$true] %s791
          %s793 = sshll.u32 %s790, 4
          %s794 = int_to_ptr.hbm [resolvable:$true] %s793
          %799 = dma.vmem_to_hbm [thread:$0]  %s792, 256, %s794, %s773, 64, 64, 4
        $region40: #{tpu_custom_call.1} parent=35 // pred_fallthru
          _
        // Predicated region
        $region41: #{tpu_custom_call.1} parent=35 // pred_check
          %p800 = pneg %p189
        $region42: #{tpu_custom_call.1} parent=35 // pred_check_branch
          %802 = sbr.rel (%p800) target = $region44
        $region43: #{tpu_custom_call.1} parent=35 // pred_region
          %804 = vsyncadd %s778, 0
          %s805 = sadd.s32 %s28, %s27
          %s806 = smul.addr %s805, 8
          %s807 = scalar_lea.hbm %s5, %s806
          %s809 = sshll.u32 %s781, 4
          %s810 = int_to_ptr.vmem [resolvable:$true] %s809
          %s811 = sshll.u32 %s807, 4
          %s812 = int_to_ptr.hbm [resolvable:$true] %s811
          %814 = dma.vmem_to_hbm [thread:$0]  %s810, 128, %s812, %s778
        $region44: #{tpu_custom_call.1} parent=35 // pred_fallthru
          _
      $region36: #{tpu_custom_call.1} parent=5 // pred_fallthru
        _
      %p815 = scmp.le.s32.totalorder 2, %s18
      // Predicated region
      $region45: #{tpu_custom_call.1} parent=5 // pred_check
        %p816 = pneg %p815
      $region46: #{tpu_custom_call.1} parent=5 // pred_check_branch
        %818 = sbr.rel (%p816) target = $region48
      $region47: #{tpu_custom_call.1} parent=5 // pred_region
        %s819 = ssub.s32 %s18, 2
        // Predicated region
        $region49: #{tpu_custom_call.1} parent=47 // pred_check
          %p820 = pneg %p167
        $region50: #{tpu_custom_call.1} parent=47 // pred_check_branch
          %822 = sbr.rel (%p820) target = $region52
        $region51: #{tpu_custom_call.1} parent=47 // pred_region
          %s823 = sand.u32 %s152, 1
          %s824 = scalar_lea.sflag [#allocation3], %s823
          %s825 = sand.u32 %s152, 1
          %s826 = smul.addr %s825, 16
          %s827 = scalar_lea.vmem [#allocation2], %s826
          %829 = dma.done %s824, 256
        $region52: #{tpu_custom_call.1} parent=47 // pred_fallthru
          _
        // Predicated region
        $region53: #{tpu_custom_call.1} parent=47 // pred_check
          %p830 = pneg %p195
        $region54: #{tpu_custom_call.1} parent=47 // pred_check_branch
          %832 = sbr.rel (%p830) target = $region56
        $region55: #{tpu_custom_call.1} parent=47 // pred_region
          %s833 = sand.u32 %s180, 1
          %s834 = scalar_lea.sflag [#allocation5], %s833
          %s835 = sand.u32 %s180, 1
          %s836 = smul.addr %s835, 8
          %s837 = scalar_lea.vmem [#allocation4], %s836
          %839 = dma.done %s834, 128
        $region56: #{tpu_custom_call.1} parent=47 // pred_fallthru
          _
      $region48: #{tpu_custom_call.1} parent=5 // pred_fallthru
        _
    $region6: #{tpu_custom_call.1} parent=1 // loop_footer
      %s22 = sadd.s32 1, %s18
    $region7: #{tpu_custom_call.1} parent=1 // loop_footer_branch
      %17 = sbr.rel target = $region3
    $region8: #{tpu_custom_call.1} parent=1 // loop_exit
      _
    %840 = vsyncpa [#allocation3], 1
    %s841 = scalar_lea.sflag [#allocation3], 1
    %842 = vsyncpa %s841, 1
    %843 = vsyncpa [#allocation5], 1
    %s844 = scalar_lea.sflag [#allocation5], 1
    %845 = vsyncpa %s844, 1

</llo_original>
